<compile_context>
chip_gen: v6e
topology: v6e:2x2x1
jax: 0.10.0
libtpu: 0.0.40
codegen_flags: <defaults>
</compile_context>

<pallas_src>
import math

import jax
import jax.numpy as jnp
from jax.experimental import pallas as pl
from jax.experimental.pallas import tpu as pltpu

_LANES = 128
_MIN_TOTAL_STEPS = 8          # >= 4 grid steps per TensorCore on v7x (2 TCs).
_MIN_BLOCK_BYTES = 1 << 20    # don't shrink blocks below ~1 MiB just for steps.

_BUDGET_CACHE = None
_FOLD_PROBE_CACHE = {}


def _round_down(x, m):
    return (x // m) * m


def _lcm(a, b):
    return a * b // math.gcd(a, b)


def _vmem_budget():
    """(per-half-block byte budget, vmem_limit_bytes), generation-aware.

    Resident working set per grid step is ~ 2 (double buffer) * 3 blocks =
    6 * half_block.  128-MiB-VMEM parts (v5e/v6e) get 8 MiB / 96 MiB; 64-MiB
    parts (v7x) keep the conservative 4 MiB / 48 MiB so we never OOM there.
    """
    global _BUDGET_CACHE
    if _BUDGET_CACHE is None:
        half_block, vmem_limit = 4 << 20, 48 << 20
        try:
            cap = int(pltpu.get_tpu_info().vmem_capacity_bytes)
            if cap >= (100 << 20):
                half_block, vmem_limit = 8 << 20, 96 << 20
        except Exception:
            pass
        _BUDGET_CACHE = (half_block, vmem_limit)
    return _BUDGET_CACHE


def _sublane_multiple(itemsize):
    # Sub-32-bit dtypes pack rows along sublanes: f32 -> 8, bf16/f16 -> 16,
    # int8/fp8 -> 32.  Keeps row tiles fully packed in vregs.
    return 8 * max(1, 4 // max(1, int(itemsize)))


def _pick_row_tile(P, row_bytes, itemsize, n_cols=1):
    """Rows per block: dtype-aware sublane multiple, sized from the VMEM
    budget, shrunk (while blocks stay >= ~1 MiB) so the grid has enough steps
    to pipeline, with a mild preference for an even total step count."""
    mult = _sublane_multiple(itemsize)
    if P <= mult:
        return P
    row_bytes = max(int(row_bytes), 1)
    half_budget, _ = _vmem_budget()
    tp = max(mult, _round_down(min(half_budget // row_bytes, P), mult))
    # Pipeline hygiene: >= _MIN_TOTAL_STEPS total steps so the BlockSpec
    # double-buffer has something to overlap (>= 4 per TC on v7x).
    while (pl.cdiv(P, tp) * n_cols < _MIN_TOTAL_STEPS and tp > mult
           and (tp // 2) * row_bytes >= _MIN_BLOCK_BYTES):
        tp = max(mult, _round_down(tp // 2, mult))
    # Prefer an even total step count (v7x shards grid steps over 2 TCs).
    steps = pl.cdiv(P, tp) * n_cols
    if steps % 2 == 1 and P > tp:
        tp2 = max(mult, _round_down(pl.cdiv(P, pl.cdiv(P, tp) + 1), mult))
        if tp2 < tp and (pl.cdiv(P, tp2) * n_cols) % 2 == 0:
            tp = tp2
    return tp


def _glu_split_kernel(a_ref, b_ref, o_ref):
    # a/b arrive as separate lane-dense blocks (split done by BlockSpec
    # index_maps) -> pure VPU/EUP work, no in-kernel relayout.  Compute stays
    # in the native dtype.  (If a bundle profile ever showed VALU saturation
    # from the sigmoid lowering, switch to 0.5*(tanh(0.5*b)+1) to keep the
    # transcendental on the EUP slot; HBM-bound today, so left as-is.)
    o_ref[...] = (a_ref[...] * jax.nn.sigmoid(b_ref[...])).astype(o_ref.dtype)


def _glu_fused_kernel(x_ref, o_ref):
    # Full-width (TP, 2M) block, halves split in-kernel.  When M % 128 == 0
    # the split is a free lane-aligned view and all loads/stores are dense;
    # otherwise this is the masked-store last resort.
    m = o_ref.shape[-1]
    o_ref[...] = (x_ref[:, :m] * jax.nn.sigmoid(x_ref[:, m:])).astype(o_ref.dtype)


def _glu_fused_folded_kernel(x_ref, o_ref):
    # Narrow-half fallback with lane-dense stores: compute (TP, M), then
    # sublane->lane repack to (TP*M/128, 128) so the output stores are
    # unmasked `vst` instead of M-of-128-lane `vst.msk`.
    # TODO(synk): the (TP, 2M) input loads are still narrow for tiny M;
    # folding the reads as well needs an in-register a/b de-interleave.
    m = x_ref.shape[-1] // 2
    res = x_ref[:, :m] * jax.nn.sigmoid(x_ref[:, m:])
    o_ref[...] = res.reshape(o_ref.shape).astype(o_ref.dtype)


def _folded_call(x2d, P, M, TP, vmem_limit):
    """pallas_call for the folded (lane-dense-store) narrow-half path."""
    blk_rows = (TP * M) // _LANES
    out_rows = (P * M) // _LANES
    return pl.pallas_call(
        _glu_fused_folded_kernel,
        out_shape=jax.ShapeDtypeStruct((out_rows, _LANES), x2d.dtype),
        grid_spec=pltpu.PrefetchScalarGridSpec(
            num_scalar_prefetch=0,
            grid=(pl.cdiv(P, TP),),
            in_specs=[pl.BlockSpec((TP, 2 * M), lambda i: (i, 0))],
            out_specs=pl.BlockSpec((blk_rows, _LANES), lambda i: (i, 0)),
        ),
        compiler_params=pltpu.CompilerParams(
            dimension_semantics=("parallel",),
            vmem_limit_bytes=vmem_limit),
    )(x2d)


def _folded_supported(M, dtype, probe_P, probe_TP):
    """One-time probe (per (M, dtype, shape-class)): does this Mosaic build
    lower the in-kernel sublane->lane repack, and does it round-trip
    correctly?  Runs eagerly on a tiny concrete input; on any failure the
    caller falls back to the masked-store kernel instead of dying."""
    key = (int(M), jnp.dtype(dtype).name, int(probe_P), int(probe_TP))
    hit = _FOLD_PROBE_CACHE.get(key)
    if hit is not None:
        return hit
    ok = False
    try:
        xp = (jnp.arange(probe_P * 2 * M, dtype=jnp.float32)
              .reshape(probe_P, 2 * M) % 7.0 - 3.0).astype(dtype)
        got = jax.block_until_ready(
            _folded_call(xp, probe_P, M, probe_TP, _vmem_budget()[1]))
        ref = xp[:, :M] * jax.nn.sigmoid(xp[:, M:])
        ok = bool(jnp.allclose(got.reshape(probe_P, M).astype(jnp.float32),
                               ref.astype(jnp.float32), atol=1e-2, rtol=1e-2))
    except Exception:
        ok = False
    _FOLD_PROBE_CACHE[key] = ok
    return ok


def _glu_2d(x2d):
    """x2d: [P, 2*M] (row = a-half | b-half, contiguous) -> [P, M]."""
    P, twoM = x2d.shape
    M = twoM // 2
    dtype = x2d.dtype
    itemsize = jnp.dtype(dtype).itemsize
    _, vmem_limit = _vmem_budget()

    if M % _LANES == 0:
        # ---- Fast path: everything lane-dense, no in-kernel relayout. ----
        TM = M
        while TM > 4096 and TM % 2 == 0 and (TM // 2) % _LANES == 0:
            TM //= 2
        n_cols = M // TM
        TP = _pick_row_tile(P, TM * itemsize, itemsize, n_cols)
        if n_cols == 1:
            # Single (TP, 2M) input block; the a/b split is a free
            # lane-aligned in-kernel view (M % 128 == 0): 2 DMAs/step instead
            # of 3 and one contiguous 2M-wide read burst per row.
            return pl.pallas_call(
                _glu_fused_kernel,
                out_shape=jax.ShapeDtypeStruct((P, M), dtype),
                grid_spec=pltpu.PrefetchScalarGridSpec(
                    num_scalar_prefetch=0,
                    grid=(pl.cdiv(P, TP),),
                    in_specs=[pl.BlockSpec((TP, twoM), lambda i: (i, 0))],
                    out_specs=pl.BlockSpec((TP, M), lambda i: (i, 0)),
                ),
                compiler_params=pltpu.CompilerParams(
                    dimension_semantics=("parallel",),
                    vmem_limit_bytes=vmem_limit),
            )(x2d)
        # Wide halves: column-tiled; a/b extracted by the DMA via index_maps
        # (the same array is passed twice).
        return pl.pallas_call(
            _glu_split_kernel,
            out_shape=jax.ShapeDtypeStruct((P, M), dtype),
            grid_spec=pltpu.PrefetchScalarGridSpec(
                num_scalar_prefetch=0,
                grid=(pl.cdiv(P, TP), n_cols),
                in_specs=[
                    pl.BlockSpec((TP, TM), lambda i, j: (i, j)),           # a
                    pl.BlockSpec((TP, TM), lambda i, j: (i, j + n_cols)),  # b
                ],
                out_specs=pl.BlockSpec((TP, TM), lambda i, j: (i, j)),
            ),
            compiler_params=pltpu.CompilerParams(
                dimension_semantics=("parallel", "parallel"),
                vmem_limit_bytes=vmem_limit),
        )(x2d, x2d)

    # ---- Fallback: half-width not a multiple of 128. ----
    if M < _LANES and (P * M) % _LANES == 0:
        # Lane-dense folded stores: pick TP so TP*M % (128*sublane_mult) == 0
        # (review: TP*M % 1024 == 0 for f32), so both the in-kernel repack and
        # the folded output blocks are tile-aligned.
        mult = _sublane_multiple(itemsize)
        T0 = _lcm(mult, (_LANES * mult) // math.gcd(M, _LANES * mult))
        if P <= T0:
            TP = P                       # single block: shapes = full extents.
            probe_P, probe_TP = P, P
        else:
            TP = _pick_row_tile(P, M * itemsize, itemsize, 1)
            TP = max(T0, _round_down(TP, T0))
            probe_P, probe_TP = 2 * T0, T0
        if _folded_supported(M, dtype, probe_P, probe_TP):
            out2d = _folded_call(x2d, P, M, TP, vmem_limit)
            return out2d.reshape(P, M)

    # Last resort: masked narrow stores (half-width >= 128 but unaligned, or
    # shapes the folded path cannot cover / this build cannot lower).
    TP = _pick_row_tile(P, M * itemsize, itemsize, 1)
    return pl.pallas_call(
        _glu_fused_kernel,
        out_shape=jax.ShapeDtypeStruct((P, M), dtype),
        grid_spec=pltpu.PrefetchScalarGridSpec(
            num_scalar_prefetch=0,
            grid=(pl.cdiv(P, TP),),
            in_specs=[pl.BlockSpec((TP, twoM), lambda i: (i, 0))],
            out_specs=pl.BlockSpec((TP, M), lambda i: (i, 0)),
        ),
        compiler_params=pltpu.CompilerParams(
            dimension_semantics=("parallel",),
            vmem_limit_bytes=vmem_limit),
    )(x2d)


class CustomGLU:
    """JAX/Pallas equivalent of the PyTorch CustomGLU module."""

    def __init__(self, dim=-1):
        self.dim = dim

    def __call__(self, x):
        dim = self.dim % x.ndim
        size = x.shape[dim]
        assert size % 2 == 0, "GLU dim size must be even"
        half = size // 2

        # Contiguous 2-D view: [P, 2*M] with the a-half in columns [0, M) and
        # the b-half in [M, 2M).  Pure reshape for any `dim` -- no transposes.
        pre = x.shape[:dim]
        post = x.shape[dim + 1:]
        P = int(math.prod(pre)) if pre else 1
        Q = int(math.prod(post)) if post else 1
        M = half * Q

        x2d = x.reshape(P, 2 * M)
        out2d = _glu_2d(x2d)
        return out2d.reshape(*pre, half, *post)


if __name__ == "__main__":
    key = jax.random.PRNGKey(0)
    k1, k2, k3 = jax.random.split(key, 3)

    # 1) Default module: dim=-1, narrow half (half=16, M=16) -> exercises the
    #    lane-dense folded fallback (or the masked fallback if the sublane->
    #    lane repack cannot lower on this build; both are correct).
    glu = CustomGLU(dim=-1)
    x = jax.random.normal(k1, (2, 4, 16, 32), dtype=jnp.float32)
    out = jax.block_until_ready(glu(x))
    assert out.shape == (2, 4, 16, 16), out.shape
    a, b = jnp.split(x, 2, axis=-1)
    ref = a * jax.nn.sigmoid(b)
    assert jnp.allclose(out, ref, atol=1e-6), float(jnp.max(jnp.abs(out - ref)))

    # 2) Channel split on an NCHW-like input (dim=1) -> transpose-free,
    #    lane-dense single-input fast path (M = 4*16*16 = 1024).
    glu_c = CustomGLU(dim=1)
    x2 = jax.random.normal(k2, (2, 8, 16, 16), dtype=jnp.float32)
    out2 = jax.block_until_ready(glu_c(x2))
    a2, b2 = jnp.split(x2, 2, axis=1)
    ref2 = a2 * jax.nn.sigmoid(b2)
    assert out2.shape == (2, 4, 16, 16)
    assert jnp.allclose(out2, ref2, atol=1e-6)

    # 3) bf16, dim=-1 -> exercises the dtype-aware (16-row) sublane rounding;
    #    compared against an f32 reference with a low-precision tolerance.
    glu_b = CustomGLU(dim=-1)
    x3 = jax.random.normal(k3, (4, 8, 64), dtype=jnp.bfloat16)
    out3 = jax.block_until_ready(glu_b(x3))
    a3, b3 = jnp.split(x3, 2, axis=-1)
    ref3 = a3.astype(jnp.float32) * jax.nn.sigmoid(b3.astype(jnp.float32))
    assert out3.shape == (4, 8, 32)
    assert jnp.allclose(out3.astype(jnp.float32), ref3, atol=2e-2, rtol=2e-2)

    print("KERNEL_OK")
</pallas_src>

<mosaic_0001>
module attributes {stable_mosaic.version = 11 : i64} {
  func.func @_glu_fused_folded_kernel(%arg0: i32, %arg1: memref<64x32xf32, #tpu.memory_space<vmem>>, %arg2: memref<8x128xf32, #tpu.memory_space<vmem>>) attributes {dimension_semantics = [#tpu.dimension_semantics<parallel>], iteration_bounds = array<i64: 2>, scalar_prefetch = 0 : i64, scratch_operands = 0 : i64, tpu.core_type = #tpu.core_type<tc>, window_params = [{transform_indices = @transform_0, window_bounds = array<i64: 64, 32>}, {transform_indices = @transform_1, window_bounds = array<i64: 8, 128>}]} {
    %c0 = arith.constant 0 : index
    %c0_0 = arith.constant 0 : index
    %0 = vector.load %arg1[%c0, %c0_0] : memref<64x32xf32, #tpu.memory_space<vmem>>, vector<64x16xf32>
    %c0_1 = arith.constant 0 : index
    %c16 = arith.constant 16 : index
    %1 = vector.load %arg1[%c0_1, %c16] : memref<64x32xf32, #tpu.memory_space<vmem>>, vector<64x16xf32>
    %2 = arith.negf %1 : vector<64x16xf32>
    %3 = math.exp %2 : vector<64x16xf32>
    %cst = arith.constant 1.000000e+00 : f32
    %4 = vector.broadcast %cst : f32 to vector<64x16xf32>
    %5 = arith.addf %4, %3 : vector<64x16xf32>
    %6 = arith.divf %4, %5 : vector<64x16xf32>
    %7 = arith.mulf %0, %6 : vector<64x16xf32>
    %8 = vector.shape_cast %7 : vector<64x16xf32> to vector<8x128xf32>
    %c0_2 = arith.constant 0 : index
    %c0_3 = arith.constant 0 : index
    %9 = vector.load %arg2[%c0_2, %c0_3] : memref<8x128xf32, #tpu.memory_space<vmem>>, vector<8x128xf32>
    tpu.vector_store %arg2[%c0_2, %c0_3], %8 {strides = array<i32>} : memref<8x128xf32, #tpu.memory_space<vmem>>, vector<8x128xf32>,
    return
  }
  func.func @transform_0(%arg0: i32) -> (i32, i32) {
    %c0_i32 = arith.constant 0 : i32
    %c0_i32_0 = arith.constant 0 : i32
    return %arg0, %c0_i32 : i32, i32
  }
  func.func @transform_1(%arg0: i32) -> (i32, i32) {
    %c0_i32 = arith.constant 0 : i32
    %c0_i32_0 = arith.constant 0 : i32
    return %arg0, %c0_i32 : i32, i32
  }
}

module attributes {stable_mosaic.version = 11 : i64} {
  func.func @_glu_fused_kernel(%arg0: i32, %arg1: memref<128x32xf32, #tpu.memory_space<vmem>>, %arg2: memref<128x16xf32, #tpu.memory_space<vmem>>) attributes {dimension_semantics = [#tpu.dimension_semantics<parallel>], iteration_bounds = array<i64: 1>, scalar_prefetch = 0 : i64, scratch_operands = 0 : i64, tpu.core_type = #tpu.core_type<tc>, window_params = [{transform_indices = @transform_0, window_bounds = array<i64: 128, 32>}, {transform_indices = @transform_1, window_bounds = array<i64: 128, 16>}]} {
    %c0 = arith.constant 0 : index
    %c0_0 = arith.constant 0 : index
    %0 = vector.load %arg1[%c0, %c0_0] : memref<128x32xf32, #tpu.memory_space<vmem>>, vector<128x16xf32>
    %c0_1 = arith.constant 0 : index
    %c16 = arith.constant 16 : index
    %1 = vector.load %arg1[%c0_1, %c16] : memref<128x32xf32, #tpu.memory_space<vmem>>, vector<128x16xf32>
    %2 = arith.negf %1 : vector<128x16xf32>
    %3 = math.exp %2 : vector<128x16xf32>
    %cst = arith.constant 1.000000e+00 : f32
    %4 = vector.broadcast %cst : f32 to vector<128x16xf32>
    %5 = arith.addf %4, %3 : vector<128x16xf32>
    %6 = arith.divf %4, %5 : vector<128x16xf32>
    %7 = arith.mulf %0, %6 : vector<128x16xf32>
    %c0_2 = arith.constant 0 : index
    %c0_3 = arith.constant 0 : index
    %8 = vector.load %arg2[%c0_2, %c0_3] : memref<128x16xf32, #tpu.memory_space<vmem>>, vector<128x16xf32>
    tpu.vector_store %arg2[%c0_2, %c0_3], %7 {strides = array<i32>} : memref<128x16xf32, #tpu.memory_space<vmem>>, vector<128x16xf32>,
    return
  }
  func.func @transform_0(%arg0: i32) -> (i32, i32) {
    %c0_i32 = arith.constant 0 : i32
    %c0_i32_0 = arith.constant 0 : i32
    return %arg0, %c0_i32 : i32, i32
  }
  func.func @transform_1(%arg0: i32) -> (i32, i32) {
    %c0_i32 = arith.constant 0 : i32
    %c0_i32_0 = arith.constant 0 : i32
    return %arg0, %c0_i32 : i32, i32
  }
}

</mosaic_0001>

<llo_original>
// kernel: tpu_custom_call.1
$region0: #{tpu_custom_call.1}
  #allocation0 [shape = 'u32[]', space=smem, size = 0x4, offset = 0x4, fixed_abs, tag = 'smem constant byte address 0x4 - core index']
  #allocation1 [shape = 'u32[144,128]{1,0:T(1,128)}', space=vmem, size = 0x12000, scoped, tag = 'internal scratch']
  %s0 = inlined_call_operand.vmem [shape: f32[128,32], index: 0, kind: input, shape index: {}]
  %s1 = inlined_call_operand.vmem [shape: f32[128,16], index: 1, kind: output, shape index: {}]
  %s2 = sld [smem:[#allocation0]]
  $region14: #{tpu_custom_call.1} parent=0
    _
  %s4 = ssub.s32 1, %s2
  %s5 = scalar_select 0, %s4, %s2
  // Predicated region
  $region2: #{tpu_custom_call.1} parent=0 // pred_check
    _
  $region3: #{tpu_custom_call.1} parent=0 // pred_check_branch
    %7 = sbr.rel (0) target = $region5
  $region4: #{tpu_custom_call.1} parent=0 // pred_region
    _
  $region5: #{tpu_custom_call.1} parent=0 // pred_fallthru
    _
  %v8 = vld [vmem:[%s0] sm:$0xff]
  %v9 = vld [vmem:[%s0 + $0x8] sm:$0xff]
  %v10 = vld [vmem:[%s0 + $0x10] sm:$0xff]
  %v11 = vld [vmem:[%s0 + $0x18] sm:$0xff]
  %v12 = vld [vmem:[%s0 + $0x20] sm:$0xff]
  %v13 = vld [vmem:[%s0 + $0x28] sm:$0xff]
  %v14 = vld [vmem:[%s0 + $0x30] sm:$0xff]
  %v15 = vld [vmem:[%s0 + $0x38] sm:$0xff]
  %v16 = vld [vmem:[%s0 + $0x40] sm:$0xff]
  %v17 = vld [vmem:[%s0 + $0x48] sm:$0xff]
  %v18 = vld [vmem:[%s0 + $0x50] sm:$0xff]
  %v19 = vld [vmem:[%s0 + $0x58] sm:$0xff]
  %v20 = vld [vmem:[%s0 + $0x60] sm:$0xff]
  %v21 = vld [vmem:[%s0 + $0x68] sm:$0xff]
  %v22 = vld [vmem:[%s0 + $0x70] sm:$0xff]
  %v23 = vld [vmem:[%s0 + $0x78] sm:$0xff]
  %v24 = vxor.u32 %v8, 2147483648
  %v25 = vxor.u32 %v9, 2147483648
  %v26 = vxor.u32 %v10, 2147483648
  %v27 = vxor.u32 %v11, 2147483648
  %v28 = vxor.u32 %v12, 2147483648
  %v29 = vxor.u32 %v13, 2147483648
  %v30 = vxor.u32 %v14, 2147483648
  %v31 = vxor.u32 %v15, 2147483648
  %v32 = vxor.u32 %v16, 2147483648
  %v33 = vxor.u32 %v17, 2147483648
  %v34 = vxor.u32 %v18, 2147483648
  %v35 = vxor.u32 %v19, 2147483648
  %v36 = vxor.u32 %v20, 2147483648
  %v37 = vxor.u32 %v21, 2147483648
  %v38 = vxor.u32 %v22, 2147483648
  %v39 = vxor.u32 %v23, 2147483648
  %v40 = vmul.f32 %v24, 1.442695
  %v41 = vpow.pop %v40
  %v42 = vmul.f32 %v25, 1.442695
  %v43 = vpow.pop %v42
  %v44 = vmul.f32 %v26, 1.442695
  %v45 = vpow.pop %v44
  %v46 = vmul.f32 %v27, 1.442695
  %v47 = vpow.pop %v46
  %v48 = vmul.f32 %v28, 1.442695
  %v49 = vpow.pop %v48
  %v50 = vmul.f32 %v29, 1.442695
  %v51 = vpow.pop %v50
  %v52 = vmul.f32 %v30, 1.442695
  %v53 = vpow.pop %v52
  %v54 = vmul.f32 %v31, 1.442695
  %v55 = vpow.pop %v54
  %v56 = vmul.f32 %v32, 1.442695
  %v57 = vpow.pop %v56
  %v58 = vmul.f32 %v33, 1.442695
  %v59 = vpow.pop %v58
  %v60 = vmul.f32 %v34, 1.442695
  %v61 = vpow.pop %v60
  %v62 = vmul.f32 %v35, 1.442695
  %v63 = vpow.pop %v62
  %v64 = vmul.f32 %v36, 1.442695
  %v65 = vpow.pop %v64
  %v66 = vmul.f32 %v37, 1.442695
  %v67 = vpow.pop %v66
  %v68 = vmul.f32 %v38, 1.442695
  %v69 = vpow.pop %v68
  %v70 = vmul.f32 %v39, 1.442695
  %v71 = vpow.pop %v70
  %v72 = vadd.f32 %v41, 1.0
  %v73 = vadd.f32 %v43, 1.0
  %v74 = vadd.f32 %v45, 1.0
  %v75 = vadd.f32 %v47, 1.0
  %v76 = vadd.f32 %v49, 1.0
  %v77 = vadd.f32 %v51, 1.0
  %v78 = vadd.f32 %v53, 1.0
  %v79 = vadd.f32 %v55, 1.0
  %v80 = vadd.f32 %v57, 1.0
  %v81 = vadd.f32 %v59, 1.0
  %v82 = vadd.f32 %v61, 1.0
  %v83 = vadd.f32 %v63, 1.0
  %v84 = vadd.f32 %v65, 1.0
  %v85 = vadd.f32 %v67, 1.0
  %v86 = vadd.f32 %v69, 1.0
  %v87 = vadd.f32 %v71, 1.0
  %v88 = vrcp.pop %v72
  %v89 = vmul.f32 1.0, %v88
  %v90 = vrcp.pop %v73
  %v91 = vmul.f32 1.0, %v90
  %v92 = vrcp.pop %v74
  %v93 = vmul.f32 1.0, %v92
  %v94 = vrcp.pop %v75
  %v95 = vmul.f32 1.0, %v94
  %v96 = vrcp.pop %v76
  %v97 = vmul.f32 1.0, %v96
  %v98 = vrcp.pop %v77
  %v99 = vmul.f32 1.0, %v98
  %v100 = vrcp.pop %v78
  %v101 = vmul.f32 1.0, %v100
  %v102 = vrcp.pop %v79
  %v103 = vmul.f32 1.0, %v102
  %v104 = vrcp.pop %v80
  %v105 = vmul.f32 1.0, %v104
  %v106 = vrcp.pop %v81
  %v107 = vmul.f32 1.0, %v106
  %v108 = vrcp.pop %v82
  %v109 = vmul.f32 1.0, %v108
  %v110 = vrcp.pop %v83
  %v111 = vmul.f32 1.0, %v110
  %v112 = vrcp.pop %v84
  %v113 = vmul.f32 1.0, %v112
  %v114 = vrcp.pop %v85
  %v115 = vmul.f32 1.0, %v114
  %v116 = vrcp.pop %v86
  %v117 = vmul.f32 1.0, %v116
  %v118 = vrcp.pop %v87
  %v119 = vmul.f32 1.0, %v118
  %136 = vrot.lane.b32.xlu0 %v89, 112
  %v137 = vpop.permute.xlu0 %136
  %138 = vrot.lane.b32.xlu0 %v91, 112
  %v139 = vpop.permute.xlu0 %138
  %140 = vrot.lane.b32.xlu0 %v93, 112
  %v141 = vpop.permute.xlu0 %140
  %142 = vrot.lane.b32.xlu0 %v95, 112
  %v143 = vpop.permute.xlu0 %142
  %144 = vrot.lane.b32.xlu0 %v97, 112
  %v145 = vpop.permute.xlu0 %144
  %146 = vrot.lane.b32.xlu0 %v99, 112
  %v147 = vpop.permute.xlu0 %146
  %148 = vrot.lane.b32.xlu0 %v101, 112
  %v149 = vpop.permute.xlu0 %148
  %150 = vrot.lane.b32.xlu0 %v103, 112
  %v151 = vpop.permute.xlu0 %150
  %152 = vrot.lane.b32.xlu0 %v105, 112
  %v153 = vpop.permute.xlu0 %152
  %154 = vrot.lane.b32.xlu0 %v107, 112
  %v155 = vpop.permute.xlu0 %154
  %156 = vrot.lane.b32.xlu0 %v109, 112
  %v157 = vpop.permute.xlu0 %156
  %158 = vrot.lane.b32.xlu0 %v111, 112
  %v159 = vpop.permute.xlu0 %158
  %160 = vrot.lane.b32.xlu0 %v113, 112
  %v161 = vpop.permute.xlu0 %160
  %162 = vrot.lane.b32.xlu0 %v115, 112
  %v163 = vpop.permute.xlu0 %162
  %164 = vrot.lane.b32.xlu0 %v117, 112
  %v165 = vpop.permute.xlu0 %164
  %166 = vrot.lane.b32.xlu0 %v119, 112
  %v167 = vpop.permute.xlu0 %166
  %v184 = vmul.f32 %v8, %v137
  %v185 = vmul.f32 %v9, %v139
  %v186 = vmul.f32 %v10, %v141
  %v187 = vmul.f32 %v11, %v143
  %v188 = vmul.f32 %v12, %v145
  %v189 = vmul.f32 %v13, %v147
  %v190 = vmul.f32 %v14, %v149
  %v191 = vmul.f32 %v15, %v151
  %v192 = vmul.f32 %v16, %v153
  %v193 = vmul.f32 %v17, %v155
  %v194 = vmul.f32 %v18, %v157
  %v195 = vmul.f32 %v19, %v159
  %v196 = vmul.f32 %v20, %v161
  %v197 = vmul.f32 %v21, %v163
  %v198 = vmul.f32 %v22, %v165
  %v199 = vmul.f32 %v23, %v167
  %vm200 = vcmask 130048
  %201 = vst.msk [vmem:[%s1] sm:$0xff] %vm200, %v184
  %202 = vst.msk [vmem:[%s1 + $0x8] sm:$0xff] %vm200, %v185
  %203 = vst.msk [vmem:[%s1 + $0x10] sm:$0xff] %vm200, %v186
  %204 = vst.msk [vmem:[%s1 + $0x18] sm:$0xff] %vm200, %v187
  %205 = vst.msk [vmem:[%s1 + $0x20] sm:$0xff] %vm200, %v188
  %206 = vst.msk [vmem:[%s1 + $0x28] sm:$0xff] %vm200, %v189
  %207 = vst.msk [vmem:[%s1 + $0x30] sm:$0xff] %vm200, %v190
  %208 = vst.msk [vmem:[%s1 + $0x38] sm:$0xff] %vm200, %v191
  %209 = vst.msk [vmem:[%s1 + $0x40] sm:$0xff] %vm200, %v192
  %210 = vst.msk [vmem:[%s1 + $0x48] sm:$0xff] %vm200, %v193
  %211 = vst.msk [vmem:[%s1 + $0x50] sm:$0xff] %vm200, %v194
  %212 = vst.msk [vmem:[%s1 + $0x58] sm:$0xff] %vm200, %v195
  %213 = vst.msk [vmem:[%s1 + $0x60] sm:$0xff] %vm200, %v196
  %214 = vst.msk [vmem:[%s1 + $0x68] sm:$0xff] %vm200, %v197
  %215 = vst.msk [vmem:[%s1 + $0x70] sm:$0xff] %vm200, %v198
  %216 = vst.msk [vmem:[%s1 + $0x78] sm:$0xff] %vm200, %v199
  // Predicated region
  $region6: #{tpu_custom_call.1} parent=0 // pred_check
    _
  $region7: #{tpu_custom_call.1} parent=0 // pred_check_branch
    %218 = sbr.rel (0) target = $region9
  $region8: #{tpu_custom_call.1} parent=0 // pred_region
    _
  $region9: #{tpu_custom_call.1} parent=0 // pred_fallthru
    _
  // Predicated region
  $region10: #{tpu_custom_call.1} parent=0 // pred_check
    _
  $region11: #{tpu_custom_call.1} parent=0 // pred_check_branch
    %220 = sbr.rel (0) target = $region13
  $region12: #{tpu_custom_call.1} parent=0 // pred_region
    _
  $region13: #{tpu_custom_call.1} parent=0 // pred_fallthru
    _

</llo_original>
